<compile_context>
chip_gen: v7x
topology: tpu7x:2x2x1
jax: 0.10.0
libtpu: 0.0.40
codegen_flags: <defaults>
</compile_context>

<pallas_src>
import math

import jax
import jax.numpy as jnp
import numpy as np
from jax import lax
from jax.experimental import pallas as pl
from jax.experimental.pallas import tpu as pltpu


def _vmem_capacity_bytes():
    """Physical VMEM per TensorCore; falls back to the v7x value (64 MiB)."""
    try:
        info = pltpu.get_tpu_info()
        cap = int(getattr(info, "vmem_capacity_bytes", 0) or 0)
        if cap > 0:
            return cap
    except Exception:
        pass
    return 64 << 20


def _choose_tiles(B, C, HW, x_isz, w_isz, budget, max_spatial_lanes=None):
    """Pick (batch_tile, spatial_tile).

    Rules:
      * spatial tile is lane-dense: a multiple of 128, or HW itself if HW<128;
      * grow the spatial tile first (it does not grow the scratch
        accumulators), then the batch tile, until the x block reaches a few
        MiB or the VMEM budget is hit;
      * whenever B >= 2, keep at least two batch blocks so the "parallel"
        batch grid axis can shard across v7x's two TensorCores;
      * the budget accounts for double-buffered x blocks, the (bt, C, 128)
        f32 sum/max scratch, the double-buffered resident weight and the
        output block.
    """
    ST_CAP = 16384           # bounds the in-kernel chunk unroll (<= 128 chunks)
    TARGET_BLOCK = 4 << 20   # aim for >= 4 MiB per x block (per buffer)

    if HW < 128:
        st_hi = HW
    else:
        st_hi = min((HW // 128) * 128, ST_CAP)
        if max_spatial_lanes is not None:
            st_hi = max(128, min(st_hi, (max_spatial_lanes // 128) * 128))

    def acc_lanes_for(st):
        return st if st < 128 else 128

    def need(bt, st):
        return (2 * bt * C * st * x_isz                 # double-buffered x blocks
                + 2 * bt * C * acc_lanes_for(st) * 4    # sum + max scratch (f32)
                + 2 * C * C * w_isz                     # resident weight (2 buffers)
                + 2 * bt * C * x_isz)                   # output block (tiny)

    def max_st(bt):
        if need(bt, st_hi) <= budget:
            return st_hi
        if HW < 128:
            return None
        fixed = 2 * bt * C * 128 * 4 + 2 * C * C * w_isz + 2 * bt * C * x_isz
        avail = budget - fixed
        if avail <= 0:
            return None
        st = (avail // (2 * bt * C * x_isz)) // 128 * 128
        if st < 128:
            return None
        return min(int(st), st_hi)

    divisors = sorted(d for d in range(1, B + 1) if B % d == 0)
    cands = [d for d in divisors if d < B] if B >= 2 else divisors

    best = None
    for bt in cands:                 # smallest bt first: grow st before bt
        st = max_st(bt)
        if st is None:
            continue
        blk = bt * C * st * x_isz
        if blk >= TARGET_BLOCK:
            return bt, st
        if best is None or blk > best[2]:
            best = (bt, st, blk)
    if best is not None:
        return best[0], best[1]
    # Pathological (budget below the minimum tile): fall back to the smallest
    # tile; the caller raises vmem_limit toward the actual need.
    return cands[0], (HW if HW < 128 else 128)


def _make_kernel(hw, st, acc_lanes, needs_mask, num_s, group=4):
    inv_hw = 1.0 / float(hw)
    tail_valid = hw - (num_s - 1) * st   # valid lanes in the last spatial tile

    def _accumulate(x_ref, sum_acc, max_acc, valid_lanes):
        full = valid_lanes // acc_lanes            # fully-valid chunks
        rem = valid_lanes - full * acc_lanes       # lanes in the one partial chunk

        def load(i):
            return x_ref[:, :, pl.ds(i * acc_lanes, acc_lanes)].astype(jnp.float32)

        # Grouped accumulation: one scratch read-modify-write per `group`
        # streamed chunks instead of one per chunk.
        for g0 in range(0, full, group):
            g1 = min(g0 + group, full)
            c = load(g0)
            loc_sum = c
            loc_max = c
            for i in range(g0 + 1, g1):
                c = load(i)
                loc_sum = loc_sum + c
                loc_max = jnp.maximum(loc_max, c)
            sum_acc[...] += loc_sum
            max_acc[...] = jnp.maximum(max_acc[...], loc_max)

        if rem:
            # Single partial chunk at the ragged tail: static lane threshold,
            # garbage lanes of the partial block become 0 (sum) / -inf (max).
            c = load(full)
            lane = lax.broadcasted_iota(jnp.int32, (1, 1, acc_lanes), 2)
            valid = lane < rem
            sum_acc[...] += jnp.where(valid, c, 0.0)
            max_acc[...] = jnp.maximum(max_acc[...], jnp.where(valid, c, -jnp.inf))
        # Chunks entirely past `valid_lanes` are never loaded.

    def kernel(x_ref, w_ref, o_ref, sum_acc, max_acc):
        s = pl.program_id(1)

        @pl.when(s == 0)
        def _init():
            sum_acc[...] = jnp.zeros_like(sum_acc)
            max_acc[...] = jnp.full(max_acc.shape, -jnp.inf, max_acc.dtype)

        if needs_mask and num_s > 1:
            # Hot path: every spatial tile but the last is fully valid.
            @pl.when(s < num_s - 1)
            def _hot():
                _accumulate(x_ref, sum_acc, max_acc, st)

            @pl.when(s == num_s - 1)
            def _tail():
                _accumulate(x_ref, sum_acc, max_acc, tail_valid)
        else:
            _accumulate(x_ref, sum_acc, max_acc, st if not needs_mask else tail_valid)

        @pl.when(s == num_s - 1)
        def _finalize():
            avg = jnp.sum(sum_acc[...], axis=-1) * inv_hw      # (bt, C)
            mx = jnp.max(max_acc[...], axis=-1)                # (bt, C)
            p = avg + mx                                       # shared-weight fusion
            w = w_ref[...].astype(jnp.float32)                 # (C_out, C_in)
            y = lax.dot_general(p, w, (((1,), (1,)), ((), ())),
                                preferred_element_type=jnp.float32)
            o_ref[...] = jax.nn.sigmoid(y)[:, None, :].astype(o_ref.dtype)

    return kernel


def channel_attention_conv(x, conv_weight, *, max_spatial_lanes=None):
    """x: (B, C, H, W) NCHW, conv_weight: (C, C, k). Returns (B, C, 1, 1)."""
    B, C, H, W = x.shape
    HW = H * W
    k = conv_weight.shape[-1]
    w_center = conv_weight[:, :, (k - 1) // 2]    # only the center tap sees data
    x_flat = x.reshape(B, C, HW)                  # layout-free reshape

    x_isz = jnp.dtype(x.dtype).itemsize
    w_isz = jnp.dtype(w_center.dtype).itemsize

    vmem_cap = _vmem_capacity_bytes()
    budget = (3 * vmem_cap) // 4                  # ~48 MiB v7x, ~96 MiB v5e/v6e

    bt, st = _choose_tiles(B, C, HW, x_isz, w_isz, budget, max_spatial_lanes)
    grid_b = B // bt
    num_s = pl.cdiv(HW, st)
    needs_mask = (num_s * st) != HW
    acc_lanes = st if st < 128 else 128

    kernel = _make_kernel(HW, st, acc_lanes, needs_mask, num_s, group=4)

    # Full VMEM accounting (matches _choose_tiles): x double-buffer + scratch
    # + weight buffers + output block, with margin; clamped to the chip.
    need = (2 * bt * C * st * x_isz + 2 * bt * C * acc_lanes * 4
            + 2 * C * C * w_isz + 2 * bt * C * x_isz)
    vmem_limit = min(max(int(need * 1.25) + (4 << 20), 16 << 20),
                     max(vmem_cap - (2 << 20), 16 << 20))

    cost = pl.CostEstimate(
        flops=int(2 * B * C * C + 3 * B * C * HW),
        transcendentals=int(B * C),
        bytes_accessed=int(B * C * HW * x_isz + C * C * w_isz + B * C * x_isz),
    )

    out = pl.pallas_call(
        kernel,
        out_shape=jax.ShapeDtypeStruct((B, 1, C), x.dtype),
        grid_spec=pltpu.PrefetchScalarGridSpec(
            num_scalar_prefetch=0,
            grid=(grid_b, num_s),                        # spatial reduction axis last
            in_specs=[
                pl.BlockSpec((bt, C, st), lambda b, s: (b, 0, s)),
                # Constant index_map: Mosaic DMAs the weight once and keeps it
                # resident; its buffer reservation is counted in `need`.
                pl.BlockSpec((C, C), lambda b, s: (0, 0)),
            ],
            out_specs=pl.BlockSpec((bt, 1, C), lambda b, s: (b, 0, 0)),
            scratch_shapes=[
                pltpu.VMEM((bt, C, acc_lanes), jnp.float32),   # running sum
                pltpu.VMEM((bt, C, acc_lanes), jnp.float32),   # running max
            ],
        ),
        compiler_params=pltpu.CompilerParams(
            dimension_semantics=("parallel", "arbitrary"),
            vmem_limit_bytes=int(vmem_limit),
        ),
        cost_estimate=cost,
    )(x_flat, w_center)

    return out.reshape(B, C, 1, 1)


def _kernel_size_for(channels, gamma=2, b=1):
    ks = int(abs((math.log(channels, 2) + b) / gamma))
    return ks if ks % 2 else ks + 1


def _run_case(B, C, H, W, case_idx, max_spatial_lanes=None):
    ks = _kernel_size_for(C)

    key = jax.random.fold_in(jax.random.PRNGKey(0), case_idx)
    kx, kw = jax.random.split(key)
    x = jax.random.normal(kx, (B, C, H, W), dtype=jnp.float32)
    bound = 1.0 / math.sqrt(C * ks)
    conv_weight = jax.random.uniform(
        kw, (C, C, ks), jnp.float32, minval=-bound, maxval=bound)

    out = jax.block_until_ready(
        channel_attention_conv(x, conv_weight, max_spatial_lanes=max_spatial_lanes))
    assert out.shape == (B, C, 1, 1)

    # Float64 host reference of the PyTorch forward.
    xn = np.asarray(x, dtype=np.float64)
    wn = np.asarray(conv_weight, dtype=np.float64)[:, :, (ks - 1) // 2]
    avg = xn.mean(axis=(2, 3))
    mx = xn.max(axis=(2, 3))
    logit = (avg + mx) @ wn.T
    ref = (1.0 / (1.0 + np.exp(-logit))).reshape(B, C, 1, 1)

    # Tolerance covers a possible bf16-pass MXU matmul at default precision
    # (HIGHEST was dropped per perf feedback); pooling itself is exact f32.
    np.testing.assert_allclose(np.asarray(out, dtype=np.float64), ref,
                               rtol=2e-3, atol=2e-3)


if __name__ == "__main__":
    # 1) Nominal module sizes: single spatial tile, grid_b=2 (both TCs busy).
    _run_case(2, 4, 16, 16, 0)
    # 2) Ragged spatial streaming: HW=576 forced into 512-lane tiles ->
    #    unmasked hot tile + masked 64-lane tail, accumulate/finalize split.
    _run_case(2, 16, 24, 24, 1, max_spatial_lanes=512)
    # 3) Multi-tile spatial without masking + batch tile > 1 (bt=2, grid_b=2).
    _run_case(4, 8, 16, 16, 2, max_spatial_lanes=128)
    print("KERNEL_OK")
</pallas_src>

<mosaic_0001>
module attributes {stable_mosaic.version = 11 : i64} {
  func.func @kernel(%arg0: i32, %arg1: i32, %arg2: memref<1x4x256xf32, #tpu.memory_space<vmem>>, %arg3: memref<4x4xf32, #tpu.memory_space<vmem>>, %arg4: memref<1x1x4xf32, #tpu.memory_space<vmem>>, %arg5: memref<1x4x128xf32, #tpu.memory_space<vmem>>, %arg6: memref<1x4x128xf32, #tpu.memory_space<vmem>>) attributes {dimension_semantics = [#tpu.dimension_semantics<parallel>, #tpu.dimension_semantics<arbitrary>], iteration_bounds = array<i64: 2, 1>, scalar_prefetch = 0 : i64, scratch_operands = 2 : i64, tpu.core_type = #tpu.core_type<tc>, window_params = [{transform_indices = @transform_0, window_bounds = array<i64: 1, 4, 256>}, {pipeline_mode = #tpu.pipeline_mode<synchronous>, transform_indices = @transform_1, window_bounds = array<i64: 4, 4>}, {transform_indices = @transform_2, window_bounds = array<i64: 1, 1, 4>}]} {
    %c0_i32 = arith.constant 0 : i32
    %0 = arith.cmpi eq, %arg1, %c0_i32 : i32
    %1 = arith.extui %0 : i1 to i32
    %c0_i32_0 = arith.constant 0 : i32
    %2 = arith.cmpi ne, %1, %c0_i32_0 : i32
    scf.if %2 {
      %cst = arith.constant 0.000000e+00 : f32
      %16 = vector.broadcast %cst : f32 to vector<1x4x128xf32>
      %c0_19 = arith.constant 0 : index
      %c0_20 = arith.constant 0 : index
      %c0_21 = arith.constant 0 : index
      %17 = vector.load %arg5[%c0_19, %c0_20, %c0_21] : memref<1x4x128xf32, #tpu.memory_space<vmem>>, vector<1x4x128xf32>
      tpu.vector_store %arg5[%c0_19, %c0_20, %c0_21], %16 {strides = array<i32>} : memref<1x4x128xf32, #tpu.memory_space<vmem>>, vector<1x4x128xf32>,
      %cst_22 = arith.constant 0xFF800000 : f32
      %18 = vector.broadcast %cst_22 : f32 to vector<1x4x128xf32>
      %c0_23 = arith.constant 0 : index
      %c0_24 = arith.constant 0 : index
      %c0_25 = arith.constant 0 : index
      %19 = vector.load %arg6[%c0_23, %c0_24, %c0_25] : memref<1x4x128xf32, #tpu.memory_space<vmem>>, vector<1x4x128xf32>
      tpu.vector_store %arg6[%c0_23, %c0_24, %c0_25], %18 {strides = array<i32>} : memref<1x4x128xf32, #tpu.memory_space<vmem>>, vector<1x4x128xf32>,
    } else {
    }
    %c0 = arith.constant 0 : index
    %c0_1 = arith.constant 0 : index
    %c0_2 = arith.constant 0 : index
    %3 = vector.load %arg2[%c0, %c0_1, %c0_2] : memref<1x4x256xf32, #tpu.memory_space<vmem>>, vector<1x4x128xf32>
    %c0_3 = arith.constant 0 : index
    %c0_4 = arith.constant 0 : index
    %c128 = arith.constant 128 : index
    %4 = vector.load %arg2[%c0_3, %c0_4, %c128] : memref<1x4x256xf32, #tpu.memory_space<vmem>>, vector<1x4x128xf32>
    %5 = arith.addf %3, %4 : vector<1x4x128xf32>
    %6 = arith.maximumf %3, %4 : vector<1x4x128xf32>
    %c0_5 = arith.constant 0 : index
    %c0_6 = arith.constant 0 : index
    %c0_7 = arith.constant 0 : index
    %7 = vector.load %arg5[%c0_5, %c0_6, %c0_7] : memref<1x4x128xf32, #tpu.memory_space<vmem>>, vector<1x4x128xf32>
    %8 = arith.addf %7, %5 : vector<1x4x128xf32>
    %c0_8 = arith.constant 0 : index
    %c0_9 = arith.constant 0 : index
    %c0_10 = arith.constant 0 : index
    %9 = vector.load %arg5[%c0_8, %c0_9, %c0_10] : memref<1x4x128xf32, #tpu.memory_space<vmem>>, vector<1x4x128xf32>
    tpu.vector_store %arg5[%c0_8, %c0_9, %c0_10], %8 {strides = array<i32>} : memref<1x4x128xf32, #tpu.memory_space<vmem>>, vector<1x4x128xf32>,
    %c0_11 = arith.constant 0 : index
    %c0_12 = arith.constant 0 : index
    %c0_13 = arith.constant 0 : index
    %10 = vector.load %arg6[%c0_11, %c0_12, %c0_13] : memref<1x4x128xf32, #tpu.memory_space<vmem>>, vector<1x4x128xf32>
    %11 = arith.maximumf %10, %6 : vector<1x4x128xf32>
    %c0_14 = arith.constant 0 : index
    %c0_15 = arith.constant 0 : index
    %c0_16 = arith.constant 0 : index
    %12 = vector.load %arg6[%c0_14, %c0_15, %c0_16] : memref<1x4x128xf32, #tpu.memory_space<vmem>>, vector<1x4x128xf32>
    tpu.vector_store %arg6[%c0_14, %c0_15, %c0_16], %11 {strides = array<i32>} : memref<1x4x128xf32, #tpu.memory_space<vmem>>, vector<1x4x128xf32>,
    %c0_i32_17 = arith.constant 0 : i32
    %13 = arith.cmpi eq, %arg1, %c0_i32_17 : i32
    %14 = arith.extui %13 : i1 to i32
    %c0_i32_18 = arith.constant 0 : i32
    %15 = arith.cmpi ne, %14, %c0_i32_18 : i32
    scf.if %15 {
      %c0_19 = arith.constant 0 : index
      %c0_20 = arith.constant 0 : index
      %c0_21 = arith.constant 0 : index
      %16 = vector.load %arg5[%c0_19, %c0_20, %c0_21] : memref<1x4x128xf32, #tpu.memory_space<vmem>>, vector<1x4x128xf32>
      %cst = arith.constant dense<0.000000e+00> : vector<1x4xf32>
      %17 = vector.multi_reduction <add>, %16, %cst [2] : vector<1x4x128xf32> to vector<1x4xf32>
      %cst_22 = arith.constant 3.906250e-03 : f32
      %18 = vector.broadcast %cst_22 : f32 to vector<1x4xf32>
      %19 = arith.mulf %17, %18 : vector<1x4xf32>
      %c0_23 = arith.constant 0 : index
      %c0_24 = arith.constant 0 : index
      %c0_25 = arith.constant 0 : index
      %20 = vector.load %arg6[%c0_23, %c0_24, %c0_25] : memref<1x4x128xf32, #tpu.memory_space<vmem>>, vector<1x4x128xf32>
      %cst_26 = arith.constant dense<0xFF800000> : vector<1x4xf32>
      %21 = vector.multi_reduction <maximumf>, %20, %cst_26 [2] : vector<1x4x128xf32> to vector<1x4xf32>
      %22 = arith.addf %19, %21 : vector<1x4xf32>
      %c0_27 = arith.constant 0 : index
      %c0_28 = arith.constant 0 : index
      %23 = vector.load %arg3[%c0_27, %c0_28] : memref<4x4xf32, #tpu.memory_space<vmem>>, vector<4x4xf32>
      %cst_29 = arith.constant dense<0.000000e+00> : vector<1x4xf32>
      %24 = tpu.matmul %22, %23, %cst_29 {dimension_numbers = #tpu.dot_dimension_numbers<[1], [1], [0], [0], [0, 0, 1, 0], [], []>} : vector<1x4xf32>, vector<4x4xf32>, vector<1x4xf32> -> vector<1x4xf32>
      %25 = arith.negf %24 : vector<1x4xf32>
      %26 = math.exp %25 : vector<1x4xf32>
      %cst_30 = arith.constant 1.000000e+00 : f32
      %27 = vector.broadcast %cst_30 : f32 to vector<1x4xf32>
      %28 = arith.addf %27, %26 : vector<1x4xf32>
      %29 = arith.divf %27, %28 : vector<1x4xf32>
      %30 = vector.shape_cast %29 : vector<1x4xf32> to vector<1x1x4xf32>
      %c0_31 = arith.constant 0 : index
      %c0_32 = arith.constant 0 : index
      %c0_33 = arith.constant 0 : index
      %31 = vector.load %arg4[%c0_31, %c0_32, %c0_33] : memref<1x1x4xf32, #tpu.memory_space<vmem>>, vector<1x1x4xf32>
      tpu.vector_store %arg4[%c0_31, %c0_32, %c0_33], %30 {strides = array<i32>} : memref<1x1x4xf32, #tpu.memory_space<vmem>>, vector<1x1x4xf32>,
    } else {
    }
    return
  }
  func.func @transform_0(%arg0: i32, %arg1: i32) -> (i32, i32, i32) {
    %c0_i32 = arith.constant 0 : i32
    %c0_i32_0 = arith.constant 0 : i32
    return %arg0, %c0_i32, %arg1 : i32, i32, i32
  }
  func.func @transform_1(%arg0: i32, %arg1: i32) -> (i32, i32) {
    %c0_i32 = arith.constant 0 : i32
    %c0_i32_0 = arith.constant 0 : i32
    %c0_i32_1 = arith.constant 0 : i32
    return %c0_i32, %c0_i32_0 : i32, i32
  }
  func.func @transform_2(%arg0: i32, %arg1: i32) -> (i32, i32, i32) {
    %c0_i32 = arith.constant 0 : i32
    %c0_i32_0 = arith.constant 0 : i32
    %c0_i32_1 = arith.constant 0 : i32
    return %arg0, %c0_i32, %c0_i32_0 : i32, i32, i32
  }
}

</mosaic_0001>

<llo_original>
// kernel: tpu_custom_call.1
$region0: #{tpu_custom_call.1}
  #allocation0 [shape = 'u32[]', space=smem, size = 0x4, offset = 0x4, fixed_abs, tag = 'smem constant byte address 0x4 - core index']
  #allocation1 [shape = 'u32[144,128]{1,0:T(1,128)}', space=vmem, size = 0x12000, scoped, tag = 'internal scratch']
  #allocation2 [shape = 'f32[1,4,128]{2,1,0:T(4,128)}', space=vmem, size = 0x800, scoped, tag = 'scratch operand']
  #allocation3 [shape = 'f32[1,4,128]{2,1,0:T(4,128)}', space=vmem, size = 0x800, scoped, tag = 'scratch operand']
  %s0 = inlined_call_operand.hbm [shape: f32[2,4,256], index: 0, kind: input, shape index: {}]
  %s1 = inlined_call_operand.hbm [shape: f32[4,4], index: 1, kind: input, shape index: {}]
  %s2 = inlined_call_operand.hbm [shape: f32[2,1,4], index: 2, kind: output, shape index: {}]
  %s3 = sld [smem:[#allocation0]]
  $region57: #{tpu_custom_call.1} parent=0
    _
  %s5 = ssub.s32 1, %s3
  %s6 = scalar_select 0, %s5, %s3
  $region1: #{tpu_custom_call.1} parent=0
    #allocation4 [shape = 'u8[8192]{0}', space=vmem, size = 0x2000, scoped, tag = 'input window, operand 0']
    #allocation5 [shape = 's32[2]{0}', space=sflag, size = 0x8, scoped, tag = 'scoped memory for tpu_custom_call.1']
    #allocation6 [shape = 's32[2]{0}', space=sflag, size = 0x8, scoped, tag = 'scoped memory for tpu_custom_call.1']
    #allocation7 [shape = 'u8[2048]{0}', space=vmem, size = 0x800, scoped, tag = 'input window, operand 1, single buffered']
    #allocation8 [shape = 's32[1]{0}', space=sflag, size = 0x4, scoped, tag = 'scoped memory for tpu_custom_call.1']
    #allocation9 [shape = 'u8[1024]{0}', space=vmem, size = 0x400, scoped, tag = 'output window, operand 0']
    %7 = vsyncpa [#allocation5], 0
    %s8 = scalar_lea.sflag [#allocation5], 1
    %9 = vsyncpa %s8, 0
    %10 = vsyncpa [#allocation8], 0
    %11 = vsyncpa [#allocation6], 0
    %s12 = scalar_lea.sflag [#allocation6], 1
    %13 = vsyncpa %s12, 0
    loop: start=0, step=1, limit=4
    $region2: #{tpu_custom_call.1} parent=1 // loop_pre_header
      _
    $region3: #{tpu_custom_call.1} parent=1 // loop_header
      %s15 = sphi 0, %s19
      %p16 = scmp.ge.s32.totalorder %s15, 4
      %s22 = sphi 0, %s34
      %s23 = sphi 0, %s30
      %s24 = sphi 0, %s22
      %s25 = sphi 0, %s23
      %s26 = sphi 0, %s24
      %s27 = sphi 0, %s25
      %s39 = sphi 0, %s41
      %s42 = sphi 0, %s39
      %s43 = sphi 0, %s42
      %s59 = sphi 0, %s43
      %s63 = sphi 0, %s63
      %s65 = sphi 0, %s63
      %s66 = sphi 0, %s65
      %s80 = sphi 0, %s66
      %s86 = sphi 0, %s88
      %s89 = sphi 0, %s86
      %s90 = sphi 0, %s89
      %s106 = sphi 0, %s90
    $region4: #{tpu_custom_call.1} parent=1 // loop_header_branch
      %18 = sbr.rel (%p16) target = $region8
    $region5: #{tpu_custom_call.1} parent=1 // loop_body
      %s20 = ssub.s32 %s15, 1
      %s21 = ssub.s32 %s15, 2
      %s28 = sadd.s32 1, %s23
      %p29 = scmp.ge.s32.totalorder %s28, 1
      %s30 = scalar_select %p29, 0, %s28
      %s31 = sadd.s32 1, %s22
      %s32 = scalar_select %p29, %s31, %s22
      %p33 = scmp.ge.s32.totalorder %s32, 2
      %s34 = scalar_select %p33, 0, %s32
      %s35 = ssub.s32 %s22, %s34
      %s36 = ssub.s32 %s23, %s30
      %s37 = sor.u32 %s35, %s36
      %p38 = scmp.eq.s32.totalorder %s37, 0
      %s40 = sadd.s32 %s39, 1
      %s41 = scalar_select %p38, %s39, %s40
      %p44 = pneg %p38
      %p45 = scmp.eq.s32.totalorder %s15, 1
      %p46 = por %p44, %p45
      %p47 = scmp.ne.s32.totalorder %s39, %s42
      %p48 = scmp.eq.s32.totalorder %s15, 0
      %p49 = por %p47, %p48
      %p50 = scmp.ne.s32.totalorder %s39, %s42
      %p51 = scmp.eq.s32.totalorder %s20, 1
      %p52 = por %p50, %p51
      %p53 = scmp.ne.s32.totalorder %s42, %s43
      %p54 = scmp.eq.s32.totalorder %s20, 0
      %p55 = por %p53, %p54
      %p56 = scmp.ne.s32.totalorder %s42, %s43
      %p57 = scmp.eq.s32.totalorder %s21, 1
      %p58 = por %p56, %p57
      %p60 = scmp.ne.s32.totalorder %s43, %s59
      %p61 = scmp.eq.s32.totalorder %s21, 0
      %p62 = por %p60, %p61
      %s64 = sadd.s32 %s63, 1
      %p67 = scmp.eq.s32.totalorder %s15, 1
      %p68 = scmp.ne.s32.totalorder %s63, %s65
      %p69 = scmp.eq.s32.totalorder %s15, 0
      %p70 = por %p68, %p69
      %p71 = scmp.ne.s32.totalorder %s63, %s65
      %p72 = scmp.eq.s32.totalorder %s20, 1
      %p73 = por %p71, %p72
      %p74 = scmp.ne.s32.totalorder %s65, %s66
      %p75 = scmp.eq.s32.totalorder %s20, 0
      %p76 = por %p74, %p75
      %p77 = scmp.ne.s32.totalorder %s65, %s66
      %p78 = scmp.eq.s32.totalorder %s21, 1
      %p79 = por %p77, %p78
      %p81 = scmp.ne.s32.totalorder %s66, %s80
      %p82 = scmp.eq.s32.totalorder %s21, 0
      %p83 = por %p81, %p82
      %s84 = ssub.s32 %s22, %s34
      %p85 = scmp.eq.s32.totalorder %s84, 0
      %s87 = sadd.s32 %s86, 1
      %s88 = scalar_select %p85, %s86, %s87
      %p91 = pneg %p85
      %p92 = scmp.eq.s32.totalorder %s15, 1
      %p93 = por %p91, %p92
      %p94 = scmp.ne.s32.totalorder %s86, %s89
      %p95 = scmp.eq.s32.totalorder %s15, 0
      %p96 = por %p94, %p95
      %p97 = scmp.ne.s32.totalorder %s86, %s89
      %p98 = scmp.eq.s32.totalorder %s20, 1
      %p99 = por %p97, %p98
      %p100 = scmp.ne.s32.totalorder %s89, %s90
      %p101 = scmp.eq.s32.totalorder %s20, 0
      %p102 = por %p100, %p101
      %p103 = scmp.ne.s32.totalorder %s89, %s90
      %p104 = scmp.eq.s32.totalorder %s21, 1
      %p105 = por %p103, %p104
      %p107 = scmp.ne.s32.totalorder %s90, %s106
      %p108 = scmp.eq.s32.totalorder %s21, 0
      %p109 = por %p107, %p108
      %p110 = scmp.le.s32.totalorder 1, %s15
      %p111 = scmp.lt.s32.totalorder %s15, 3
      %p112 = pnand %p110, %p111
      %p113 = pneg %p112
      // Predicated region
      $region9: #{tpu_custom_call.1} parent=5 // pred_check
        _
      $region10: #{tpu_custom_call.1} parent=5 // pred_check_branch
        %115 = sbr.rel (%p112) target = $region12
      $region11: #{tpu_custom_call.1} parent=5 // pred_region
        %s116 = ssub.s32 %s15, 1
        // Predicated region
        $region13: #{tpu_custom_call.1} parent=11 // pred_check
          %p117 = pneg %p76
        $region14: #{tpu_custom_call.1} parent=11 // pred_check_branch
          %119 = sbr.rel (%p117) target = $region16
        $region15: #{tpu_custom_call.1} parent=11 // pred_region
          %s121 = ssub.s32 64, 64
          %122 = vsyncadd [#allocation8], %s121
          %s124 = sshll.u32 [#allocation7], 4
          %s125 = int_to_ptr.vmem [resolvable:$true] %s124
          %127 = dma.hbm_to_vmem [thread:$0]  %s1, 64, %s125, [#allocation8]
        $region16: #{tpu_custom_call.1} parent=11 // pred_fallthru
          _
      $region12: #{tpu_custom_call.1} parent=5 // pred_fallthru
        _
      %p128 = scmp.lt.s32.totalorder %s15, 2
      // Predicated region
      $region17: #{tpu_custom_call.1} parent=5 // pred_check
        %p129 = pneg %p128
      $region18: #{tpu_custom_call.1} parent=5 // pred_check_branch
        %131 = sbr.rel (%p129) target = $region20
      $region19: #{tpu_custom_call.1} parent=5 // pred_region
        // Predicated region
        $region21: #{tpu_custom_call.1} parent=19 // pred_check
          %p132 = pneg %p49
        $region22: #{tpu_custom_call.1} parent=19 // pred_check_branch
          %134 = sbr.rel (%p132) target = $region24
        $region23: #{tpu_custom_call.1} parent=19 // pred_region
          %s135 = sand.u32 %s39, 1
          %s136 = scalar_lea.sflag [#allocation5], %s135
          %s137 = sand.u32 %s39, 1
          %s138 = smul.addr %s137, 8
          %s139 = scalar_lea.vmem [#allocation4], %s138
          %s140 = smul.u32 2, %s23
          %s142 = ssub.s32 128, 128
          %143 = vsyncadd %s136, %s142
          %s144 = smul.addr %s22, 2
          %s145 = sadd.s32 %s140, %s144
          %s146 = smul.addr %s145, 64
          %s147 = scalar_lea.hbm %s0, %s146
          %s149 = sshll.u32 %s139, 4
          %s150 = int_to_ptr.vmem [resolvable:$true] %s149
          %152 = dma.hbm_to_vmem [thread:$0]  %s147, 128, %s150, %s136
        $region24: #{tpu_custom_call.1} parent=19 // pred_fallthru
          _
      $region20: #{tpu_custom_call.1} parent=5 // pred_fallthru
        _
      %p153 = scmp.le.s32.totalorder 1, %s15
      %p154 = scmp.lt.s32.totalorder %s15, 3
      %p155 = pnand %p153, %p154
      %p156 = pneg %p155
      // Predicated region
      $region25: #{tpu_custom_call.1} parent=5 // pred_check
        _
      $region26: #{tpu_custom_call.1} parent=5 // pred_check_branch
        %158 = sbr.rel (%p155) target = $region28
      $region27: #{tpu_custom_call.1} parent=5 // pred_region
        %s159 = ssub.s32 %s15, 1
        %s160 = sand.u32 %s42, 1
        %s161 = scalar_lea.sflag [#allocation5], %s160
        %s162 = sand.u32 %s42, 1
        %s163 = smul.addr %s162, 8
        %s164 = scalar_lea.vmem [#allocation4], %s163
        // Predicated region
        $region29: #{tpu_custom_call.1} parent=27 // pred_check
          %p165 = pneg %p55
        $region30: #{tpu_custom_call.1} parent=27 // pred_check_branch
          %167 = sbr.rel (%p165) target = $region32
        $region31: #{tpu_custom_call.1} parent=27 // pred_region
          %168 = dma.done %s161, 128
        $region32: #{tpu_custom_call.1} parent=27 // pred_fallthru
          _
        // Predicated region
        $region33: #{tpu_custom_call.1} parent=27 // pred_check
          %p169 = pneg %p76
        $region34: #{tpu_custom_call.1} parent=27 // pred_check_branch
          %171 = sbr.rel (%p169) target = $region36
        $region35: #{tpu_custom_call.1} parent=27 // pred_region
          %172 = dma.done [#allocation8], 64
        $region36: #{tpu_custom_call.1} parent=27 // pred_fallthru
          _
        %s173 = sand.u32 %s42, 1
        %s174 = scalar_lea.sflag [#allocation5], %s173
        %s175 = sand.u32 %s42, 1
        %s176 = smul.addr %s175, 8
        %s177 = scalar_lea.vmem [#allocation4], %s176
        %p178 = pneg %p55
        %p179 = pneg %p52
        %p180 = pneg %p76
        %p181 = pneg %p73
        %p182 = pneg %p102
        %p183 = pneg %p99
        %s184 = sand.u32 %s89, 1
        %s185 = scalar_lea.sflag [#allocation6], %s184
        %s186 = sand.u32 %s89, 1
        %s187 = scalar_lea.vmem [#allocation9], %s186
        %s188 = smul.u32 2, %s25
        %p189 = scmp.eq.s32.totalorder %s25, 0
        // Predicated region
        $region37: #{tpu_custom_call.1} parent=27 // pred_check
          %p190 = pneg %p189
        $region38: #{tpu_custom_call.1} parent=27 // pred_check_branch
          %192 = sbr.rel (%p190) target = $region40
        $region39: #{tpu_custom_call.1} parent=27 // pred_region
          %193 = vst [vmem:[#allocation2] sm:$0xf] 0.0
          %194 = vst [vmem:[#allocation3] sm:$0xf] -inf
        $region40: #{tpu_custom_call.1} parent=27 // pred_fallthru
          _
        %v195 = vld [vmem:[%s164] sm:$0xf]
        %v196 = vld [vmem:[%s164 + $0x4] sm:$0xf]
        %v197 = vadd.f32 %v195, %v196
        %v198 = vmax.f32 %v195, %v196
        %v199 = vld [vmem:[#allocation2] sm:$0xf]
        %v200 = vadd.f32 %v199, %v197
        %201 = vst [vmem:[#allocation2] sm:$0xf] %v200
        %v202 = vld [vmem:[#allocation3] sm:$0xf]
        %v203 = vmax.f32 %v202, %v198
        %204 = vst [vmem:[#allocation3] sm:$0xf] %v203
        // Predicated region
        $region41: #{tpu_custom_call.1} parent=27 // pred_check
          %p205 = pneg %p189
        $region42: #{tpu_custom_call.1} parent=27 // pred_check_branch
          %207 = sbr.rel (%p205) target = $region44
        $region43: #{tpu_custom_call.1} parent=27 // pred_region
          %v208 = vld [vmem:[#allocation2] sm:$0xf]
          %vm209 = vcmask 1043456
          %v210 = vsel %vm209, %v208, 0.0
          %211 = vadd.xlane.f32.xlu0 %v210
          %v212 = vpop.xlane.xlu0 %211
          %v213 = vmul.f32 %v212, 0.00390625
          %v214 = vld [vmem:[#allocation3] sm:$0xf]
          %v215 = vsel %vm209, %v214, -inf
          %216 = vmax.xlane.f32.xlu0 %v215
          %v217 = vpop.xlane.xlu0 %216
          %v218 = vadd.f32 %v213, %v217
          %v219 = vld [vmem:[#allocation7] sm:$0xf]
          %v221 = vlaneseq
          %v222 = vand.u32 %v221, 127
          %v223 = vlaneseq
          %v224 = vshrl.u32 %v223, 7
          %v225 = vsub.s32 %v222, %v224
          %v226 = vrot.slane %v218, %v225
          %vm227 = vcmask 31744
          %v228 = vsel %vm227, %v226, 0
          %v231 = vsel %vm227, %v219, 0
          %233 = vmatprep.subr.mxu0 0.0
          %234 = vmatpush1.xpose.msra.mxu0 %v231
          %235 = vmatprep.subr.mxu0 0.0
          %236 = vmatpush1.xpose.msra.mxu0 0.0
          %237 = vmatprep.subr.mxu0 0.0
          %238 = vmatpush1.xpose.msra.mxu0 0.0
          %239 = vmatprep.subr.mxu0 0.0
          %240 = vmatpush1.xpose.msra.mxu0 0.0
          %241 = vmatprep.subr.mxu0 0.0
          %242 = vmatpush1.xpose.msra.mxu0 0.0
          %243 = vmatprep.subr.mxu0 0.0
          %244 = vmatpush1.xpose.msra.mxu0 0.0
          %245 = vmatprep.subr.mxu0 0.0
          %246 = vmatpush1.xpose.msra.mxu0 0.0
          %247 = vmatprep.subr.mxu0 0.0
          %248 = vmatpush1.xpose.msra.mxu0 0.0
          %249 = vmatprep.subr.mxu0 0.0
          %250 = vmatpush1.xpose.msra.mxu0 0.0
          %251 = vmatprep.subr.mxu0 0.0
          %252 = vmatpush1.xpose.msra.mxu0 0.0
          %253 = vmatprep.subr.mxu0 0.0
          %254 = vmatpush1.xpose.msra.mxu0 0.0
          %255 = vmatprep.subr.mxu0 0.0
          %256 = vmatpush1.xpose.msra.mxu0 0.0
          %257 = vmatprep.subr.mxu0 0.0
          %258 = vmatpush1.xpose.msra.mxu0 0.0
          %259 = vmatprep.subr.mxu0 0.0
          %260 = vmatpush1.xpose.msra.mxu0 0.0
          %261 = vmatprep.subr.mxu0 0.0
          %262 = vmatpush1.xpose.msra.mxu0 0.0
          %263 = vmatprep.subr.mxu0 0.0
          %264 = vmatpush1.xpose.msra.mxu0 0.0
          %265 = vmatprep.subr.mxu0 0.0
          %266 = vmatpush1.xpose.msra.mxu0 0.0
          %267 = vmatprep.subr.mxu0 0.0
          %268 = vmatpush1.xpose.msra.mxu0 0.0
          %269 = vmatprep.subr.mxu0 0.0
          %270 = vmatpush1.xpose.msra.mxu0 0.0
          %271 = vmatprep.subr.mxu0 0.0
          %272 = vmatpush1.xpose.msra.mxu0 0.0
          %273 = vmatprep.subr.mxu0 0.0
          %274 = vmatpush1.xpose.msra.mxu0 0.0
          %275 = vmatprep.subr.mxu0 0.0
          %276 = vmatpush1.xpose.msra.mxu0 0.0
          %277 = vmatprep.subr.mxu0 0.0
          %278 = vmatpush1.xpose.msra.mxu0 0.0
          %279 = vmatprep.subr.mxu0 0.0
          %280 = vmatpush1.xpose.msra.mxu0 0.0
          %281 = vmatprep.subr.mxu0 0.0
          %282 = vmatpush1.xpose.msra.mxu0 0.0
          %283 = vmatprep.subr.mxu0 0.0
          %284 = vmatpush1.xpose.msra.mxu0 0.0
          %285 = vmatprep.subr.mxu0 0.0
          %286 = vmatpush1.xpose.msra.mxu0 0.0
          %287 = vmatprep.subr.mxu0 0.0
          %288 = vmatpush1.xpose.msra.mxu0 0.0
          %289 = vmatprep.subr.mxu0 0.0
          %290 = vmatpush1.xpose.msra.mxu0 0.0
          %291 = vmatprep.subr.mxu0 0.0
          %292 = vmatpush1.xpose.msra.mxu0 0.0
          %293 = vmatprep.subr.mxu0 0.0
          %294 = vmatpush1.xpose.msra.mxu0 0.0
          %295 = vmatprep.subr.mxu0 0.0
          %296 = vmatpush1.xpose.msra.mxu0 0.0
          %297 = vmatprep.mubr.f32.mxu0 0.0
          %298 = vmatmul.mubr.f32.gmra.mrb[0].mxu0 %v228
          %v299 = vpop.f32.mrb[0].mxu0
          %v300 = vadd.f32 0.0, %v299
          %v301 = vpop.f32.mrb[0].mxu0
          %302 = vdwg.mxu0
          %v303 = vxor.u32 %v300, 2147483648
          %v304 = vmul.f32 %v303, 1.442695
          %v305 = vpow.pop %v304
          %v306 = vadd.f32 %v305, 1.0
          %v307 = vrcp.pop %v306
          %v308 = vmul.f32 1.0, %v307
          %vm309 = vcmask 24576
          %310 = vst.msk [vmem:[%s187] sm:$0x1] %vm309, %v308
        $region44: #{tpu_custom_call.1} parent=27 // pred_fallthru
          _
        %s311 = sand.u32 %s89, 1
        %s312 = scalar_lea.sflag [#allocation6], %s311
        %s313 = sand.u32 %s89, 1
        %s314 = scalar_lea.vmem [#allocation9], %s313
        // Predicated region
        $region45: #{tpu_custom_call.1} parent=27 // pred_check
          %p315 = pneg %p99
        $region46: #{tpu_custom_call.1} parent=27 // pred_check_branch
          %317 = sbr.rel (%p315) target = $region48
        $region47: #{tpu_custom_call.1} parent=27 // pred_region
          %s319 = ssub.s32 16, 16
          %320 = vsyncadd %s312, %s319
          %s321 = smul.addr %s24, 16
          %s322 = scalar_lea.hbm %s2, %s321
          %s324 = sshll.u32 %s314, 4
          %s325 = int_to_ptr.vmem [resolvable:$true] %s324
          %327 = dma.vmem_to_hbm [thread:$0]  %s325, 16, %s322, %s312
        $region48: #{tpu_custom_call.1} parent=27 // pred_fallthru
          _
      $region28: #{tpu_custom_call.1} parent=5 // pred_fallthru
        _
      %p328 = scmp.le.s32.totalorder 2, %s15
      // Predicated region
      $region49: #{tpu_custom_call.1} parent=5 // pred_check
        %p329 = pneg %p328
      $region50: #{tpu_custom_call.1} parent=5 // pred_check_branch
        %331 = sbr.rel (%p329) target = $region52
      $region51: #{tpu_custom_call.1} parent=5 // pred_region
        %s332 = ssub.s32 %s15, 2
        // Predicated region
        $region53: #{tpu_custom_call.1} parent=51 // pred_check
          %p333 = pneg %p105
        $region54: #{tpu_custom_call.1} parent=51 // pred_check_branch
          %335 = sbr.rel (%p333) target = $region56
        $region55: #{tpu_custom_call.1} parent=51 // pred_region
          %s336 = sand.u32 %s90, 1
          %s337 = scalar_lea.sflag [#allocation6], %s336
          %s338 = sand.u32 %s90, 1
          %s339 = scalar_lea.vmem [#allocation9], %s338
          %340 = dma.done %s337, 16
        $region56: #{tpu_custom_call.1} parent=51 // pred_fallthru
          _
      $region52: #{tpu_custom_call.1} parent=5 // pred_fallthru
        _
    $region6: #{tpu_custom_call.1} parent=1 // loop_footer
      %s19 = sadd.s32 1, %s15
    $region7: #{tpu_custom_call.1} parent=1 // loop_footer_branch
      %14 = sbr.rel target = $region3
    $region8: #{tpu_custom_call.1} parent=1 // loop_exit
      _
    %341 = vsyncpa [#allocation5], 1
    %s342 = scalar_lea.sflag [#allocation5], 1
    %343 = vsyncpa %s342, 1
    %344 = vsyncpa [#allocation8], 1
    %345 = vsyncpa [#allocation6], 1
    %s346 = scalar_lea.sflag [#allocation6], 1
    %347 = vsyncpa %s346, 1

</llo_original>
